<compile_context>
chip_gen: v5e
topology: v5e:2x2
jax: 0.10.0
libtpu: 0.0.40
codegen_flags: <defaults>
</compile_context>

<pallas_src>
import jax
import jax.numpy as jnp
from jax import lax
from jax.experimental import pallas as pl
from jax.experimental.pallas import tpu as pltpu


def _round_up(x, m):
    return ((x + m - 1) // m) * m


def _axis_plan(dim, align, target):
    """Return (tile, padded_dim) for one matmul axis.

    If the axis fits in a single tile, keep it whole but round up to `align`
    (align=1 skips rounding; used for K where padding buys nothing).
    Otherwise tile at `target` and pad the axis to a multiple of it.
    """
    if dim <= target:
        t = _round_up(dim, align)
        return t, t
    return target, _round_up(dim, target)


def dense_kernel(x_ref, w_ref, b_ref, o_ref, acc_ref):
    """Computes one (tm, tn) output tile; K is the (last, 'arbitrary') grid axis."""
    k = pl.program_id(2)

    @pl.when(k == 0)
    def _():
        acc_ref[...] = jnp.zeros_like(acc_ref)

    # x tile: (tm, tk); w tile in torch layout: (tn, tk).
    # Contract dim 1 of both -> (tm, tn) on the MXU, f32 accumulation.
    acc_ref[...] += lax.dot_general(
        x_ref[...],
        w_ref[...],
        dimension_numbers=(((1,), (1,)), ((), ())),
        preferred_element_type=jnp.float32,
    )

    @pl.when(k == pl.num_programs(2) - 1)
    def _():
        # Bias added in f32 before the final cast (v5e has no bf16 VALU path).
        o_ref[...] = (acc_ref[...] + b_ref[...]).astype(o_ref.dtype)


def dense_forward(x, weight, bias, *, tm_target=256, tn_target=256, tk_target=512):
    """x: (B, Din); weight: (Dout, Din) torch layout; bias: (Dout,).

    Returns (B, Dout, 1, 1), matching `self.dense(x)[..., None, None]`.
    """
    B, Din = x.shape
    Dout = weight.shape[0]

    tm, Mp = _axis_plan(B, 8, tm_target)       # sublane-dense rows
    tn, Np = _axis_plan(Dout, 128, tn_target)  # lane-dense output columns
    tk, Kp = _axis_plan(Din, 1, tk_target)     # reduction axis, no padding if small

    # Pad to tile multiples.  At real model sizes (B, Dout, Din already aligned)
    # these branches are skipped entirely, so nothing is copied in the hot path.
    xp = x
    if (Mp, Kp) != (B, Din):
        xp = jnp.pad(x, ((0, Mp - B), (0, Kp - Din)))
    wp = weight
    if (Np, Kp) != (Dout, Din):
        wp = jnp.pad(weight, ((0, Np - Dout), (0, Kp - Din)))
    bp = bias.astype(jnp.float32)
    if Np != Dout:
        bp = jnp.pad(bp, (0, Np - Dout))
    bp = bp.reshape(1, Np)

    grid = (Mp // tm, Np // tn, Kp // tk)

    bytes_accessed = (
        xp.size * xp.dtype.itemsize
        + wp.size * wp.dtype.itemsize
        + bp.size * bp.dtype.itemsize
        + Mp * Np * x.dtype.itemsize
    )

    y = pl.pallas_call(
        dense_kernel,
        out_shape=jax.ShapeDtypeStruct((Mp, Np), x.dtype),
        grid_spec=pltpu.PrefetchScalarGridSpec(
            num_scalar_prefetch=0,
            grid=grid,
            in_specs=[
                pl.BlockSpec((tm, tk), lambda i, j, k: (i, k)),  # x
                pl.BlockSpec((tn, tk), lambda i, j, k: (j, k)),  # weight (torch layout)
                pl.BlockSpec((1, tn), lambda i, j, k: (0, j)),   # bias
            ],
            out_specs=pl.BlockSpec((tm, tn), lambda i, j, k: (i, j)),
            scratch_shapes=[pltpu.VMEM((tm, tn), jnp.float32)],
        ),
        compiler_params=pltpu.CompilerParams(
            dimension_semantics=("parallel", "parallel", "arbitrary"),
        ),
        cost_estimate=pl.CostEstimate(
            flops=2 * Mp * Kp * Np,
            transcendentals=0,
            bytes_accessed=bytes_accessed,
        ),
    )(xp, wp, bp)

    # Drop alignment padding and reshape to 1x1 feature maps: (B, Dout, 1, 1).
    return y[:B, :Dout, None, None]


if __name__ == "__main__":
    key = jax.random.PRNGKey(0)
    k_x, k_w, k_b = jax.random.split(key, 3)

    batch = 2
    input_dim = 32      # e.g. time-embedding dim
    output_dim = 64     # channels of the conv feature map it is added to

    # Deterministic parameter init (nn.Linear shapes: W (out, in), b (out,))
    bound = 1.0 / (input_dim ** 0.5)
    weight = jax.random.uniform(k_w, (output_dim, input_dim),
                                dtype=jnp.float32, minval=-bound, maxval=bound)
    bias = jax.random.uniform(k_b, (output_dim,),
                              dtype=jnp.float32, minval=-bound, maxval=bound)

    x = jax.random.normal(k_x, (batch, input_dim), dtype=jnp.float32)

    out = dense_forward(x, weight, bias)
    out = jax.block_until_ready(out)

    # sanity check against plain-JAX reference
    ref = (x @ weight.T + bias)[..., None, None]
    assert out.shape == (batch, output_dim, 1, 1), out.shape
    assert jnp.allclose(out, ref, atol=1e-5, rtol=1e-5)

    print("KERNEL_OK")
</pallas_src>

<mosaic_0001>
module attributes {stable_mosaic.version = 11 : i64} {
  func.func @dense_kernel(%arg0: i32, %arg1: i32, %arg2: i32, %arg3: memref<8x32xf32, #tpu.memory_space<vmem>>, %arg4: memref<128x32xf32, #tpu.memory_space<vmem>>, %arg5: memref<1x128xf32, #tpu.memory_space<vmem>>, %arg6: memref<8x128xf32, #tpu.memory_space<vmem>>, %arg7: memref<8x128xf32, #tpu.memory_space<vmem>>) attributes {dimension_semantics = [#tpu.dimension_semantics<parallel>, #tpu.dimension_semantics<parallel>, #tpu.dimension_semantics<arbitrary>], iteration_bounds = array<i64: 1, 1, 1>, scalar_prefetch = 0 : i64, scratch_operands = 1 : i64, tpu.core_type = #tpu.core_type<tc>, window_params = [{transform_indices = @transform_0, window_bounds = array<i64: 8, 32>}, {transform_indices = @transform_1, window_bounds = array<i64: 128, 32>}, {transform_indices = @transform_2, window_bounds = array<i64: 1, 128>}, {transform_indices = @transform_3, window_bounds = array<i64: 8, 128>}]} {
    %c0_i32 = arith.constant 0 : i32
    %0 = arith.cmpi eq, %arg2, %c0_i32 : i32
    %1 = arith.extui %0 : i1 to i32
    %c0_i32_0 = arith.constant 0 : i32
    %2 = arith.cmpi ne, %1, %c0_i32_0 : i32
    scf.if %2 {
      %cst_10 = arith.constant 0.000000e+00 : f32
      %12 = vector.broadcast %cst_10 : f32 to vector<8x128xf32>
      %c0_11 = arith.constant 0 : index
      %c0_12 = arith.constant 0 : index
      %13 = vector.load %arg7[%c0_11, %c0_12] : memref<8x128xf32, #tpu.memory_space<vmem>>, vector<8x128xf32>
      tpu.vector_store %arg7[%c0_11, %c0_12], %12 {strides = array<i32>} : memref<8x128xf32, #tpu.memory_space<vmem>>, vector<8x128xf32>,
    } else {
    }
    %c0 = arith.constant 0 : index
    %c0_1 = arith.constant 0 : index
    %3 = vector.load %arg7[%c0, %c0_1] : memref<8x128xf32, #tpu.memory_space<vmem>>, vector<8x128xf32>
    %c0_2 = arith.constant 0 : index
    %c0_3 = arith.constant 0 : index
    %4 = vector.load %arg3[%c0_2, %c0_3] : memref<8x32xf32, #tpu.memory_space<vmem>>, vector<8x32xf32>
    %c0_4 = arith.constant 0 : index
    %c0_5 = arith.constant 0 : index
    %5 = vector.load %arg4[%c0_4, %c0_5] : memref<128x32xf32, #tpu.memory_space<vmem>>, vector<128x32xf32>
    %cst = arith.constant dense<0.000000e+00> : vector<8x128xf32>
    %6 = tpu.matmul %4, %5, %cst {dimension_numbers = #tpu.dot_dimension_numbers<[1], [1], [0], [0], [0, 0, 1, 0], [], []>} : vector<8x32xf32>, vector<128x32xf32>, vector<8x128xf32> -> vector<8x128xf32>
    %7 = arith.addf %3, %6 : vector<8x128xf32>
    %c0_6 = arith.constant 0 : index
    %c0_7 = arith.constant 0 : index
    %8 = vector.load %arg7[%c0_6, %c0_7] : memref<8x128xf32, #tpu.memory_space<vmem>>, vector<8x128xf32>
    tpu.vector_store %arg7[%c0_6, %c0_7], %7 {strides = array<i32>} : memref<8x128xf32, #tpu.memory_space<vmem>>, vector<8x128xf32>,
    %c0_i32_8 = arith.constant 0 : i32
    %9 = arith.cmpi eq, %arg2, %c0_i32_8 : i32
    %10 = arith.extui %9 : i1 to i32
    %c0_i32_9 = arith.constant 0 : i32
    %11 = arith.cmpi ne, %10, %c0_i32_9 : i32
    scf.if %11 {
      %c0_10 = arith.constant 0 : index
      %c0_11 = arith.constant 0 : index
      %12 = vector.load %arg7[%c0_10, %c0_11] : memref<8x128xf32, #tpu.memory_space<vmem>>, vector<8x128xf32>
      %c0_12 = arith.constant 0 : index
      %c0_13 = arith.constant 0 : index
      %13 = vector.load %arg5[%c0_12, %c0_13] : memref<1x128xf32, #tpu.memory_space<vmem>>, vector<1x128xf32>
      %14 = vector.broadcast %13 : vector<1x128xf32> to vector<8x128xf32>
      %15 = arith.addf %12, %14 : vector<8x128xf32>
      %c0_14 = arith.constant 0 : index
      %c0_15 = arith.constant 0 : index
      %16 = vector.load %arg6[%c0_14, %c0_15] : memref<8x128xf32, #tpu.memory_space<vmem>>, vector<8x128xf32>
      tpu.vector_store %arg6[%c0_14, %c0_15], %15 {strides = array<i32>} : memref<8x128xf32, #tpu.memory_space<vmem>>, vector<8x128xf32>,
    } else {
    }
    return
  }
  func.func @transform_0(%arg0: i32, %arg1: i32, %arg2: i32) -> (i32, i32) {
    %c0_i32 = arith.constant 0 : i32
    return %arg0, %arg2 : i32, i32
  }
  func.func @transform_1(%arg0: i32, %arg1: i32, %arg2: i32) -> (i32, i32) {
    %c0_i32 = arith.constant 0 : i32
    return %arg1, %arg2 : i32, i32
  }
  func.func @transform_2(%arg0: i32, %arg1: i32, %arg2: i32) -> (i32, i32) {
    %c0_i32 = arith.constant 0 : i32
    %c0_i32_0 = arith.constant 0 : i32
    return %c0_i32, %arg1 : i32, i32
  }
  func.func @transform_3(%arg0: i32, %arg1: i32, %arg2: i32) -> (i32, i32) {
    %c0_i32 = arith.constant 0 : i32
    return %arg0, %arg1 : i32, i32
  }
}

</mosaic_0001>

<llo_original>
// kernel: tpu_custom_call.1
$region0: #{tpu_custom_call.1}
  #allocation0 [shape = 'u32[]', space=smem, size = 0x4, offset = 0x4, fixed_abs, tag = 'smem constant byte address 0x4 - core index']
  #allocation1 [shape = 'u32[72,128]{1,0:T(1,128)}', space=vmem, size = 0x9000, scoped, tag = 'internal scratch']
  #allocation2 [shape = 'f32[8,128]{1,0:T(8,128)}', space=vmem, size = 0x1000, scoped, tag = 'scratch operand']
  %s0 = inlined_call_operand.vmem [shape: f32[8,32], index: 0, kind: input, shape index: {}]
  %s1 = inlined_call_operand.vmem [shape: f32[128,32], index: 1, kind: input, shape index: {}]
  %s2 = inlined_call_operand.vmem [shape: f32[1,128], index: 2, kind: input, shape index: {}]
  %s3 = inlined_call_operand.hbm [shape: f32[8,128], index: 3, kind: output, shape index: {}]
  %s4 = sld [smem:[#allocation0]]
  $region30: #{tpu_custom_call.1} parent=0
    _
  %s6 = ssub.s32 1, %s4
  %s7 = scalar_select 0, %s6, %s4
  $region1: #{tpu_custom_call.1} parent=0
    #allocation3 [shape = 'u8[4096]{0}', space=vmem, size = 0x1000, scoped, tag = 'output window, operand 0, single buffered']
    #allocation4 [shape = 's32[1]{0}', space=sflag, size = 0x4, scoped, tag = 'scoped memory for tpu_custom_call.1']
    %8 = vsyncpa [#allocation4], 0
    // Predicated region
    $region2: #{tpu_custom_call.1} parent=1 // pred_check
      _
    $region3: #{tpu_custom_call.1} parent=1 // pred_check_branch
      %10 = sbr.rel (0) target = $region5
    $region4: #{tpu_custom_call.1} parent=1 // pred_region
      _
    $region5: #{tpu_custom_call.1} parent=1 // pred_fallthru
      _
    // Predicated region
    $region6: #{tpu_custom_call.1} parent=1 // pred_check
      _
    $region7: #{tpu_custom_call.1} parent=1 // pred_check_branch
      %12 = sbr.rel (0) target = $region9
    $region8: #{tpu_custom_call.1} parent=1 // pred_region
      _
    $region9: #{tpu_custom_call.1} parent=1 // pred_fallthru
      _
    // Predicated region
    $region10: #{tpu_custom_call.1} parent=1 // pred_check
      _
    $region11: #{tpu_custom_call.1} parent=1 // pred_check_branch
      %14 = sbr.rel (0) target = $region13
    $region12: #{tpu_custom_call.1} parent=1 // pred_region
      _
    $region13: #{tpu_custom_call.1} parent=1 // pred_fallthru
      _
    %p15 = scmp.eq.s32.totalorder 0, 0
    // Predicated region
    $region14: #{tpu_custom_call.1} parent=1 // pred_check
      %p16 = pneg %p15
    $region15: #{tpu_custom_call.1} parent=1 // pred_check_branch
      %18 = sbr.rel (%p16) target = $region17
    $region16: #{tpu_custom_call.1} parent=1 // pred_region
      %19 = vst [vmem:[#allocation2] sm:$0xff] 0.0
    $region17: #{tpu_custom_call.1} parent=1 // pred_fallthru
      _
    %v20 = vld [vmem:[#allocation2] sm:$0xff]
    %v21 = vld [vmem:[%s0] sm:$0xff]
    %v22 = vld [vmem:[%s1] sm:$0xff]
    %v23 = vld [vmem:[%s1 + $0x8] sm:$0xff]
    %v24 = vld [vmem:[%s1 + $0x10] sm:$0xff]
    %v25 = vld [vmem:[%s1 + $0x18] sm:$0xff]
    %v26 = vld [vmem:[%s1 + $0x20] sm:$0xff]
    %v27 = vld [vmem:[%s1 + $0x28] sm:$0xff]
    %v28 = vld [vmem:[%s1 + $0x30] sm:$0xff]
    %v29 = vld [vmem:[%s1 + $0x38] sm:$0xff]
    %v30 = vld [vmem:[%s1 + $0x40] sm:$0xff]
    %v31 = vld [vmem:[%s1 + $0x48] sm:$0xff]
    %v32 = vld [vmem:[%s1 + $0x50] sm:$0xff]
    %v33 = vld [vmem:[%s1 + $0x58] sm:$0xff]
    %v34 = vld [vmem:[%s1 + $0x60] sm:$0xff]
    %v35 = vld [vmem:[%s1 + $0x68] sm:$0xff]
    %v36 = vld [vmem:[%s1 + $0x70] sm:$0xff]
    %v37 = vld [vmem:[%s1 + $0x78] sm:$0xff]
    %vm38 = vcmask 261120
    %v40 = vsel %vm38, %v21, 0
    %v43 = vsel %vm38, %v22, 0
    %v46 = vsel %vm38, %v23, 0
    %v49 = vsel %vm38, %v24, 0
    %v52 = vsel %vm38, %v25, 0
    %v55 = vsel %vm38, %v26, 0
    %v58 = vsel %vm38, %v27, 0
    %v61 = vsel %vm38, %v28, 0
    %v64 = vsel %vm38, %v29, 0
    %v67 = vsel %vm38, %v30, 0
    %v70 = vsel %vm38, %v31, 0
    %v73 = vsel %vm38, %v32, 0
    %v76 = vsel %vm38, %v33, 0
    %v79 = vsel %vm38, %v34, 0
    %v82 = vsel %vm38, %v35, 0
    %v85 = vsel %vm38, %v36, 0
    %v88 = vsel %vm38, %v37, 0
    %90 = vmatpush.xpose.msra.mxu0 %v88
    %91 = vmatpush.xpose.msra.mxu0 %v85
    %92 = vmatpush.xpose.msra.mxu0 %v82
    %93 = vmatpush.xpose.msra.mxu0 %v79
    %94 = vmatpush.xpose.msra.mxu0 %v76
    %95 = vmatpush.xpose.msra.mxu0 %v73
    %96 = vmatpush.xpose.msra.mxu0 %v70
    %97 = vmatpush.xpose.msra.mxu0 %v67
    %98 = vmatpush.xpose.msra.mxu0 %v64
    %99 = vmatpush.xpose.msra.mxu0 %v61
    %100 = vmatpush.xpose.msra.mxu0 %v58
    %101 = vmatpush.xpose.msra.mxu0 %v55
    %102 = vmatpush.xpose.msra.mxu0 %v52
    %103 = vmatpush.xpose.msra.mxu0 %v49
    %104 = vmatpush.xpose.msra.mxu0 %v46
    %105 = vmatpush.xpose.msra.mxu0 %v43
    %106 = vmatmul.f32.gmra.mxu0 %v40
    %v107 = vpop.f32.mrf.mxu0
    %v108 = vadd.f32 0.0, %v107
    %109 = vdwg.mxu0
    %v110 = vadd.f32 %v20, %v108
    %111 = vst [vmem:[#allocation2] sm:$0xff] %v110
    // Predicated region
    $region18: #{tpu_custom_call.1} parent=1 // pred_check
      %p112 = pneg %p15
    $region19: #{tpu_custom_call.1} parent=1 // pred_check_branch
      %114 = sbr.rel (%p112) target = $region21
    $region20: #{tpu_custom_call.1} parent=1 // pred_region
      %v115 = vld [vmem:[#allocation2] sm:$0xff]
      %v116 = vld [vmem:[%s2] sm:$0x1]
      %v118 = vperm.slane %v116, 0
      %v120 = vadd.f32 %v115, %v118
      %121 = vst [vmem:[#allocation3] sm:$0xff] %v120
    $region21: #{tpu_custom_call.1} parent=1 // pred_fallthru
      _
    // Predicated region
    $region22: #{tpu_custom_call.1} parent=1 // pred_check
      _
    $region23: #{tpu_custom_call.1} parent=1 // pred_check_branch
      %123 = sbr.rel (0) target = $region25
    $region24: #{tpu_custom_call.1} parent=1 // pred_region
      %125 = vsyncadd [#allocation4], 0
      %s127 = sshll.u32 [#allocation3], 4
      %s128 = int_to_ptr.vmem [resolvable:$true] %s127
      %s129 = sshll.u32 %s3, 4
      %s130 = int_to_ptr.hbm [resolvable:$true] %s129
      %132 = dma.vmem_to_hbm [thread:$0]  %s128, 128, %s130, [#allocation4]
    $region25: #{tpu_custom_call.1} parent=1 // pred_fallthru
      _
    // Predicated region
    $region26: #{tpu_custom_call.1} parent=1 // pred_check
      _
    $region27: #{tpu_custom_call.1} parent=1 // pred_check_branch
      %134 = sbr.rel (0) target = $region29
    $region28: #{tpu_custom_call.1} parent=1 // pred_region
      %136 = dma.done [#allocation4], 128
    $region29: #{tpu_custom_call.1} parent=1 // pred_fallthru
      _
    %137 = vsyncpa [#allocation4], 1

</llo_original>
